<compile_context>
chip_gen: v7x
topology: tpu7x:2x2x1
jax: 0.10.0
libtpu: 0.0.40
codegen_flags: <defaults>
</compile_context>

<pallas_src>
import numpy as np

import jax
import jax.numpy as jnp
from jax.experimental import pallas as pl
from jax.experimental.pallas import tpu as pltpu

GROUP_SIZE = 64


# ---------------------------------------------------------------------------
# Q8_0 quantization (one-time parameter setup, mirrors torch quantize_q80)
# ---------------------------------------------------------------------------
def quantize_q80(w, group_size=GROUP_SIZE):
    assert w.size % group_size == 0
    wf = w.reshape(-1, group_size).astype(jnp.float32)
    wmax = jnp.max(jnp.abs(wf), axis=1)
    scale = (wmax / 127.0).astype(jnp.float32)              # per-group scale, f32
    safe = jnp.where(scale == 0.0, 1.0, scale)              # guard all-zero groups
    q = jnp.round(wf / safe[:, None]).astype(jnp.int8)      # int8 in [-127, 127]
    return q.reshape(w.shape), scale                        # q: (N,K) i8, scale: (N*K/64,)


# ---------------------------------------------------------------------------
# One-time parameter preparation (NOT on the per-call hot path)
# ---------------------------------------------------------------------------
def prepare_params(w_q, scale, A, B, *, alpha, rank):
    """Returns (w_t, scale_t, A_p, B_p):
       w_t:     (K, N) int8      -- transposed base weight
       scale_t: (K//64, N) f32   -- COMPACT per-group scales (broadcast in-kernel)
       A_p:     (K, R) bf16
       B_p:     (R, N) bf16      -- alpha/rank folded in
    """
    N, K = w_q.shape
    assert K % GROUP_SIZE == 0
    w_t = jnp.transpose(w_q)                                         # (K, N) int8
    scale_t = jnp.transpose(scale.reshape(N, K // GROUP_SIZE))       # (K//64, N) f32
    A_p = A.astype(jnp.bfloat16)
    B_p = (B.astype(jnp.float32) * (float(alpha) / float(rank))).astype(jnp.bfloat16)
    return w_t, scale_t, A_p, B_p


# ---------------------------------------------------------------------------
# Pallas kernel
# ---------------------------------------------------------------------------
def _lora_linear_kernel(x_ref, a_ref, b_ref, wq_ref, sc_ref, o_ref, acc_ref, xa_ref):
    k = pl.program_id(2)

    @pl.when(k == 0)
    def _init():
        acc_ref[...] = jnp.zeros_like(acc_ref)
        xa_ref[...] = jnp.zeros_like(xa_ref)

    tk, tn = wq_ref.shape
    n_groups = sc_ref.shape[0]
    g = tk // n_groups

    x = x_ref[...]
    if x.dtype != jnp.bfloat16:
        x = x.astype(jnp.bfloat16)
    a = a_ref[...]
    if a.dtype != jnp.bfloat16:
        a = a.astype(jnp.bfloat16)

    # Dequantize the int8 weight tile with compact per-group scales:
    #   (tk, tn) i8 -> (n_groups, 64, tn) f32 * (n_groups, 1, tn) f32 -> (tk, tn) bf16
    w = wq_ref[...].astype(jnp.float32).reshape(n_groups, g, tn)
    w = (w * sc_ref[...][:, None, :]).reshape(tk, tn).astype(jnp.bfloat16)

    # bf16 MXU matmuls, f32 accumulation in VMEM scratch.
    acc_ref[...] += jnp.dot(x, w, preferred_element_type=jnp.float32)
    xa_ref[...] += jnp.dot(x, a, preferred_element_type=jnp.float32)

    @pl.when(k == pl.num_programs(2) - 1)
    def _finalize():
        lora = jnp.dot(xa_ref[...].astype(jnp.bfloat16), b_ref[...],
                       preferred_element_type=jnp.float32)            # B pre-scaled by alpha/rank
        o_ref[...] = (acc_ref[...] + lora).astype(o_ref.dtype)


def _pick_tile(dim, candidates):
    for c in candidates:
        if dim % c == 0:
            return c
    return dim  # fall back to the full dimension (satisfies the (8,128) rule)


def linear_with_lora(x, w_t, scale_t, A_p, B_p):
    """x: (..., K); w_t: (K, N) int8; scale_t: (K//64, N) f32; A_p: (K, R) bf16;
       B_p: (R, N) bf16 pre-scaled by alpha/rank.  Returns (..., N) in x.dtype."""
    *lead, K = x.shape
    K2, N = w_t.shape
    R = A_p.shape[1]
    assert K == K2 and K % GROUP_SIZE == 0
    M = int(np.prod(lead)) if lead else 1
    x2 = x.reshape(M, K)

    tm = _pick_tile(M, (256, 128, 64, 32, 16, 8))
    tn = _pick_tile(N, (256, 128))
    tk = _pick_tile(K, (1024, 512))          # multiples of 512 keep tk//64 a multiple of 8
    n_g = tk // GROUP_SIZE

    cost = pl.CostEstimate(
        flops=2 * M * K * N + 2 * M * K * R + 2 * M * R * N,
        transcendentals=0,
        bytes_accessed=(M * K * x.dtype.itemsize        # x (bf16)
                        + K * N                          # int8 weight
                        + (K // GROUP_SIZE) * N * 4      # compact scales
                        + K * R * 2 + R * N * 2          # LoRA A, B
                        + M * N * x.dtype.itemsize),     # output
    )

    out = pl.pallas_call(
        _lora_linear_kernel,
        out_shape=jax.ShapeDtypeStruct((M, N), x.dtype),
        grid=(M // tm, N // tn, K // tk),
        in_specs=[
            pl.BlockSpec((tm, tk), lambda i, j, k: (i, k)),     # x tile
            pl.BlockSpec((tk, R), lambda i, j, k: (k, 0)),      # A tile
            pl.BlockSpec((R, tn), lambda i, j, k: (0, j)),      # B tile (pre-scaled)
            pl.BlockSpec((tk, tn), lambda i, j, k: (k, j)),     # W^T int8 tile
            pl.BlockSpec((n_g, tn), lambda i, j, k: (k, j)),    # compact scales tile
        ],
        out_specs=pl.BlockSpec((tm, tn), lambda i, j, k: (i, j)),
        scratch_shapes=[pltpu.VMEM((tm, tn), jnp.float32),      # base+lora accumulator
                        pltpu.VMEM((tm, R), jnp.float32)],      # x@A accumulator
        compiler_params=pltpu.CompilerParams(
            dimension_semantics=("parallel", "parallel", "arbitrary")),
        cost_estimate=cost,
    )(x2, A_p, B_p, w_t, scale_t)

    return out.reshape(*lead, N)


# ---------------------------------------------------------------------------
# Reference (plain JAX, f32) for verification
# ---------------------------------------------------------------------------
def reference(x, w_q, scale, A, B, *, alpha, rank):
    N, K = w_q.shape
    s_full = jnp.repeat(scale.reshape(N, K // GROUP_SIZE), GROUP_SIZE, axis=1)
    w_deq = w_q.astype(jnp.float32) * s_full
    xf = x.astype(jnp.float32)
    base = jnp.einsum("btk,nk->btn", xf, w_deq)
    lora = (alpha / rank) * (xf @ A.astype(jnp.float32) @ B.astype(jnp.float32))
    return (base + lora).astype(x.dtype)


if __name__ == "__main__":
    # small, deterministic setup consistent with the module's forward
    batch, seq = 2, 8
    in_features, out_features = 256, 256
    rank, alpha = 8, 16.0

    key = jax.random.PRNGKey(0)
    k_x, k_w, k_a, k_b = jax.random.split(key, 4)

    # base linear weight (f32, as torch.nn.Linear would hold), then Q8_0 quantize
    w_fp = jax.random.normal(k_w, (out_features, in_features), dtype=jnp.float32) * 0.02
    w_q, w_scale = quantize_q80(w_fp, GROUP_SIZE)

    # LoRA params per LoRALayer.__init__ (A ~ randn/sqrt(rank) bf16, B = zeros bf16)
    std_dev = 1.0 / np.sqrt(rank)
    A = (jax.random.normal(k_a, (in_features, rank), dtype=jnp.float32) * std_dev).astype(jnp.bfloat16)
    B_init = jnp.zeros((rank, out_features), dtype=jnp.bfloat16)
    # extra test with non-zero B so the LoRA branch is numerically exercised
    B_rand = (jax.random.normal(k_b, (rank, out_features), dtype=jnp.float32) * 0.1).astype(jnp.bfloat16)

    x = jax.random.normal(k_x, (batch, seq, in_features), dtype=jnp.float32).astype(jnp.bfloat16)

    for B in (B_init, B_rand):
        params = prepare_params(w_q, w_scale, A, B, alpha=alpha, rank=rank)
        out = linear_with_lora(x, *params)
        out = jax.block_until_ready(out)

        ref = reference(x, w_q, w_scale, A, B, alpha=alpha, rank=rank)
        np.testing.assert_allclose(np.asarray(out, dtype=np.float32),
                                   np.asarray(ref, dtype=np.float32),
                                   rtol=2e-2, atol=2e-2)

    print("KERNEL_OK")
</pallas_src>

<mosaic_0001>
module attributes {stable_mosaic.version = 11 : i64} {
  func.func @_lora_linear_kernel(%arg0: i32, %arg1: i32, %arg2: i32, %arg3: memref<16x256xbf16, #tpu.memory_space<vmem>>, %arg4: memref<256x8xbf16, #tpu.memory_space<vmem>>, %arg5: memref<8x256xbf16, #tpu.memory_space<vmem>>, %arg6: memref<256x256xi8, #tpu.memory_space<vmem>>, %arg7: memref<4x256xf32, #tpu.memory_space<vmem>>, %arg8: memref<16x256xbf16, #tpu.memory_space<vmem>>, %arg9: memref<16x256xf32, #tpu.memory_space<vmem>>, %arg10: memref<16x8xf32, #tpu.memory_space<vmem>>) attributes {dimension_semantics = [#tpu.dimension_semantics<parallel>, #tpu.dimension_semantics<parallel>, #tpu.dimension_semantics<arbitrary>], iteration_bounds = array<i64: 1, 1, 1>, scalar_prefetch = 0 : i64, scratch_operands = 2 : i64, tpu.core_type = #tpu.core_type<tc>, window_params = [{transform_indices = @transform_0, window_bounds = array<i64: 16, 256>}, {transform_indices = @transform_1, window_bounds = array<i64: 256, 8>}, {transform_indices = @transform_2, window_bounds = array<i64: 8, 256>}, {transform_indices = @transform_3, window_bounds = array<i64: 256, 256>}, {transform_indices = @transform_4, window_bounds = array<i64: 4, 256>}, {transform_indices = @transform_5, window_bounds = array<i64: 16, 256>}]} {
    %c0_i32 = arith.constant 0 : i32
    %0 = arith.cmpi eq, %arg2, %c0_i32 : i32
    %1 = arith.extui %0 : i1 to i32
    %c0_i32_0 = arith.constant 0 : i32
    %2 = arith.cmpi ne, %1, %c0_i32_0 : i32
    scf.if %2 {
      %cst_19 = arith.constant 0.000000e+00 : f32
      %25 = vector.broadcast %cst_19 : f32 to vector<16x256xf32>
      %c0_20 = arith.constant 0 : index
      %c0_21 = arith.constant 0 : index
      %26 = vector.load %arg9[%c0_20, %c0_21] : memref<16x256xf32, #tpu.memory_space<vmem>>, vector<16x256xf32>
      tpu.vector_store %arg9[%c0_20, %c0_21], %25 {strides = array<i32>} : memref<16x256xf32, #tpu.memory_space<vmem>>, vector<16x256xf32>,
      %cst_22 = arith.constant 0.000000e+00 : f32
      %27 = vector.broadcast %cst_22 : f32 to vector<16x8xf32>
      %c0_23 = arith.constant 0 : index
      %c0_24 = arith.constant 0 : index
      %28 = vector.load %arg10[%c0_23, %c0_24] : memref<16x8xf32, #tpu.memory_space<vmem>>, vector<16x8xf32>
      tpu.vector_store %arg10[%c0_23, %c0_24], %27 {strides = array<i32>} : memref<16x8xf32, #tpu.memory_space<vmem>>, vector<16x8xf32>,
    } else {
    }
    %c0 = arith.constant 0 : index
    %c0_1 = arith.constant 0 : index
    %3 = vector.load %arg3[%c0, %c0_1] : memref<16x256xbf16, #tpu.memory_space<vmem>>, vector<16x256xbf16>
    %c0_2 = arith.constant 0 : index
    %c0_3 = arith.constant 0 : index
    %4 = vector.load %arg4[%c0_2, %c0_3] : memref<256x8xbf16, #tpu.memory_space<vmem>>, vector<256x8xbf16>
    %c0_4 = arith.constant 0 : index
    %c0_5 = arith.constant 0 : index
    %5 = vector.load %arg6[%c0_4, %c0_5] : memref<256x256xi8, #tpu.memory_space<vmem>>, vector<256x256xi8>
    %6 = arith.sitofp %5 : vector<256x256xi8> to vector<256x256xf32>
    %7 = vector.shape_cast %6 : vector<256x256xf32> to vector<4x64x256xf32>
    %c0_6 = arith.constant 0 : index
    %c0_7 = arith.constant 0 : index
    %8 = vector.load %arg7[%c0_6, %c0_7] : memref<4x256xf32, #tpu.memory_space<vmem>>, vector<4x256xf32>
    %9 = vector.shape_cast %8 : vector<4x256xf32> to vector<4x1x256xf32>
    %10 = vector.broadcast %9 : vector<4x1x256xf32> to vector<4x64x256xf32>
    %11 = arith.mulf %7, %10 : vector<4x64x256xf32>
    %12 = vector.shape_cast %11 : vector<4x64x256xf32> to vector<256x256xf32>
    %13 = arith.truncf %12 : vector<256x256xf32> to vector<256x256xbf16>
    %c0_8 = arith.constant 0 : index
    %c0_9 = arith.constant 0 : index
    %14 = vector.load %arg9[%c0_8, %c0_9] : memref<16x256xf32, #tpu.memory_space<vmem>>, vector<16x256xf32>
    %cst = arith.constant dense<0.000000e+00> : vector<16x256xf32>
    %15 = tpu.matmul %3, %13, %cst {dimension_numbers = #tpu.dot_dimension_numbers<[1], [0], [0], [1], [0, 0, 1, 1], [], []>} : vector<16x256xbf16>, vector<256x256xbf16>, vector<16x256xf32> -> vector<16x256xf32>
    %16 = arith.addf %14, %15 : vector<16x256xf32>
    %c0_10 = arith.constant 0 : index
    %c0_11 = arith.constant 0 : index
    %17 = vector.load %arg9[%c0_10, %c0_11] : memref<16x256xf32, #tpu.memory_space<vmem>>, vector<16x256xf32>
    tpu.vector_store %arg9[%c0_10, %c0_11], %16 {strides = array<i32>} : memref<16x256xf32, #tpu.memory_space<vmem>>, vector<16x256xf32>,
    %c0_12 = arith.constant 0 : index
    %c0_13 = arith.constant 0 : index
    %18 = vector.load %arg10[%c0_12, %c0_13] : memref<16x8xf32, #tpu.memory_space<vmem>>, vector<16x8xf32>
    %cst_14 = arith.constant dense<0.000000e+00> : vector<16x8xf32>
    %19 = tpu.matmul %3, %4, %cst_14 {dimension_numbers = #tpu.dot_dimension_numbers<[1], [0], [0], [1], [0, 0, 1, 1], [], []>} : vector<16x256xbf16>, vector<256x8xbf16>, vector<16x8xf32> -> vector<16x8xf32>
    %20 = arith.addf %18, %19 : vector<16x8xf32>
    %c0_15 = arith.constant 0 : index
    %c0_16 = arith.constant 0 : index
    %21 = vector.load %arg10[%c0_15, %c0_16] : memref<16x8xf32, #tpu.memory_space<vmem>>, vector<16x8xf32>
    tpu.vector_store %arg10[%c0_15, %c0_16], %20 {strides = array<i32>} : memref<16x8xf32, #tpu.memory_space<vmem>>, vector<16x8xf32>,
    %c0_i32_17 = arith.constant 0 : i32
    %22 = arith.cmpi eq, %arg2, %c0_i32_17 : i32
    %23 = arith.extui %22 : i1 to i32
    %c0_i32_18 = arith.constant 0 : i32
    %24 = arith.cmpi ne, %23, %c0_i32_18 : i32
    scf.if %24 {
      %c0_19 = arith.constant 0 : index
      %c0_20 = arith.constant 0 : index
      %25 = vector.load %arg10[%c0_19, %c0_20] : memref<16x8xf32, #tpu.memory_space<vmem>>, vector<16x8xf32>
      %26 = arith.truncf %25 : vector<16x8xf32> to vector<16x8xbf16>
      %c0_21 = arith.constant 0 : index
      %c0_22 = arith.constant 0 : index
      %27 = vector.load %arg5[%c0_21, %c0_22] : memref<8x256xbf16, #tpu.memory_space<vmem>>, vector<8x256xbf16>
      %cst_23 = arith.constant dense<0.000000e+00> : vector<16x256xf32>
      %28 = tpu.matmul %26, %27, %cst_23 {dimension_numbers = #tpu.dot_dimension_numbers<[1], [0], [0], [1], [0, 0, 1, 1], [], []>} : vector<16x8xbf16>, vector<8x256xbf16>, vector<16x256xf32> -> vector<16x256xf32>
      %c0_24 = arith.constant 0 : index
      %c0_25 = arith.constant 0 : index
      %29 = vector.load %arg9[%c0_24, %c0_25] : memref<16x256xf32, #tpu.memory_space<vmem>>, vector<16x256xf32>
      %30 = arith.addf %29, %28 : vector<16x256xf32>
      %31 = arith.truncf %30 : vector<16x256xf32> to vector<16x256xbf16>
      %c0_26 = arith.constant 0 : index
      %c0_27 = arith.constant 0 : index
      %32 = vector.load %arg8[%c0_26, %c0_27] : memref<16x256xbf16, #tpu.memory_space<vmem>>, vector<16x256xbf16>
      tpu.vector_store %arg8[%c0_26, %c0_27], %31 {strides = array<i32>} : memref<16x256xbf16, #tpu.memory_space<vmem>>, vector<16x256xbf16>,
    } else {
    }
    return
  }
  func.func @transform_0(%arg0: i32, %arg1: i32, %arg2: i32) -> (i32, i32) {
    %c0_i32 = arith.constant 0 : i32
    return %arg0, %arg2 : i32, i32
  }
  func.func @transform_1(%arg0: i32, %arg1: i32, %arg2: i32) -> (i32, i32) {
    %c0_i32 = arith.constant 0 : i32
    %c0_i32_0 = arith.constant 0 : i32
    return %arg2, %c0_i32 : i32, i32
  }
  func.func @transform_2(%arg0: i32, %arg1: i32, %arg2: i32) -> (i32, i32) {
    %c0_i32 = arith.constant 0 : i32
    %c0_i32_0 = arith.constant 0 : i32
    return %c0_i32, %arg1 : i32, i32
  }
  func.func @transform_3(%arg0: i32, %arg1: i32, %arg2: i32) -> (i32, i32) {
    %c0_i32 = arith.constant 0 : i32
    return %arg2, %arg1 : i32, i32
  }
  func.func @transform_4(%arg0: i32, %arg1: i32, %arg2: i32) -> (i32, i32) {
    %c0_i32 = arith.constant 0 : i32
    return %arg2, %arg1 : i32, i32
  }
  func.func @transform_5(%arg0: i32, %arg1: i32, %arg2: i32) -> (i32, i32) {
    %c0_i32 = arith.constant 0 : i32
    return %arg0, %arg1 : i32, i32
  }
}

</mosaic_0001>

<llo_original>
// kernel: tpu_custom_call.1
$region0: #{tpu_custom_call.1}
  #allocation0 [shape = 'u32[]', space=smem, size = 0x4, offset = 0x4, fixed_abs, tag = 'smem constant byte address 0x4 - core index']
  #allocation1 [shape = 'u32[144,128]{1,0:T(1,128)}', space=vmem, size = 0x12000, scoped, tag = 'internal scratch']
  #allocation2 [shape = 'f32[16,256]{1,0:T(8,128)}', space=vmem, size = 0x4000, scoped, tag = 'scratch operand']
  #allocation3 [shape = 'f32[16,8]{1,0:T(8,128)}', space=vmem, size = 0x2000, scoped, tag = 'scratch operand']
  %s0 = inlined_call_operand.vmem [shape: bf16[16,256], index: 0, kind: input, shape index: {}]
  %s1 = inlined_call_operand.vmem [shape: bf16[256,8], index: 1, kind: input, shape index: {}]
  %s2 = inlined_call_operand.hbm [shape: bf16[8,256], index: 2, kind: input, shape index: {}]
  %s3 = inlined_call_operand.vmem [shape: s8[256,256], index: 3, kind: input, shape index: {}]
  %s4 = inlined_call_operand.hbm [shape: f32[4,256], index: 4, kind: input, shape index: {}]
  %s5 = inlined_call_operand.hbm [shape: bf16[16,256], index: 5, kind: output, shape index: {}]
  %s6 = sld [smem:[#allocation0]]
  $region46: #{tpu_custom_call.1} parent=0
    _
  %s8 = ssub.s32 1, %s6
  %s9 = scalar_select 0, %s8, %s6
  $region1: #{tpu_custom_call.1} parent=0
    #allocation4 [shape = 'u8[4096]{0}', space=vmem, size = 0x1000, scoped, tag = 'input window, operand 2, single buffered']
    #allocation5 [shape = 's32[1]{0}', space=sflag, size = 0x4, scoped, tag = 'scoped memory for tpu_custom_call.1']
    #allocation6 [shape = 's32[1]{0}', space=sflag, size = 0x4, scoped, tag = 'scoped memory for tpu_custom_call.1']
    #allocation7 [shape = 'u8[4096]{0}', space=vmem, size = 0x1000, scoped, tag = 'input window, operand 4, single buffered']
    #allocation8 [shape = 's32[1]{0}', space=sflag, size = 0x4, scoped, tag = 'scoped memory for tpu_custom_call.1']
    #allocation9 [shape = 'u8[8192]{0}', space=vmem, size = 0x2000, scoped, tag = 'output window, operand 0, single buffered']
    %10 = vsyncpa [#allocation5], 0
    %11 = vsyncpa [#allocation8], 0
    %12 = vsyncpa [#allocation6], 0
    // Predicated region
    $region2: #{tpu_custom_call.1} parent=1 // pred_check
      _
    $region3: #{tpu_custom_call.1} parent=1 // pred_check_branch
      %14 = sbr.rel (0) target = $region5
    $region4: #{tpu_custom_call.1} parent=1 // pred_region
      _
    $region5: #{tpu_custom_call.1} parent=1 // pred_fallthru
      _
    // Predicated region
    $region6: #{tpu_custom_call.1} parent=1 // pred_check
      _
    $region7: #{tpu_custom_call.1} parent=1 // pred_check_branch
      %16 = sbr.rel (0) target = $region9
    $region8: #{tpu_custom_call.1} parent=1 // pred_region
      _
    $region9: #{tpu_custom_call.1} parent=1 // pred_fallthru
      _
    // Predicated region
    $region10: #{tpu_custom_call.1} parent=1 // pred_check
      _
    $region11: #{tpu_custom_call.1} parent=1 // pred_check_branch
      %18 = sbr.rel (0) target = $region13
    $region12: #{tpu_custom_call.1} parent=1 // pred_region
      %s20 = ssub.s32 128, 128
      %21 = vsyncadd [#allocation5], %s20
      %s23 = sshll.u32 [#allocation4], 4
      %s24 = int_to_ptr.vmem [resolvable:$true] %s23
      %26 = dma.hbm_to_vmem [thread:$0]  %s2, 128, %s24, [#allocation5]
    $region13: #{tpu_custom_call.1} parent=1 // pred_fallthru
      _
    // Predicated region
    $region14: #{tpu_custom_call.1} parent=1 // pred_check
      _
    $region15: #{tpu_custom_call.1} parent=1 // pred_check_branch
      %28 = sbr.rel (0) target = $region17
    $region16: #{tpu_custom_call.1} parent=1 // pred_region
      _
    $region17: #{tpu_custom_call.1} parent=1 // pred_fallthru
      _
    // Predicated region
    $region18: #{tpu_custom_call.1} parent=1 // pred_check
      _
    $region19: #{tpu_custom_call.1} parent=1 // pred_check_branch
      %30 = sbr.rel (0) target = $region21
    $region20: #{tpu_custom_call.1} parent=1 // pred_region
      %s32 = ssub.s32 128, 128
      %33 = vsyncadd [#allocation8], %s32
      %s35 = sshll.u32 [#allocation7], 4
      %s36 = int_to_ptr.vmem [resolvable:$true] %s35
      %38 = dma.hbm_to_vmem [thread:$0]  %s4, 128, %s36, [#allocation8]
    $region21: #{tpu_custom_call.1} parent=1 // pred_fallthru
      _
    // Predicated region
    $region22: #{tpu_custom_call.1} parent=1 // pred_check
      _
    $region23: #{tpu_custom_call.1} parent=1 // pred_check_branch
      %40 = sbr.rel (0) target = $region25
    $region24: #{tpu_custom_call.1} parent=1 // pred_region
      %41 = dma.done [#allocation5], 128
    $region25: #{tpu_custom_call.1} parent=1 // pred_fallthru
      _
    // Predicated region
    $region26: #{tpu_custom_call.1} parent=1 // pred_check
      _
    $region27: #{tpu_custom_call.1} parent=1 // pred_check_branch
      %43 = sbr.rel (0) target = $region29
    $region28: #{tpu_custom_call.1} parent=1 // pred_region
      %44 = dma.done [#allocation8], 128
    $region29: #{tpu_custom_call.1} parent=1 // pred_fallthru
      _
    %p46 = scmp.eq.s32.totalorder 0, 0
    // Predicated region
    $region30: #{tpu_custom_call.1} parent=1 // pred_check
      %p47 = pneg %p46
    $region31: #{tpu_custom_call.1} parent=1 // pred_check_branch
      %49 = sbr.rel (%p47) target = $region33
    $region32: #{tpu_custom_call.1} parent=1 // pred_region
      %50 = vst [vmem:[#allocation2] sm:$0xff] 0.0
      %51 = vst [vmem:[#allocation2 + $0x8] sm:$0xff] 0.0
      %52 = vst [vmem:[#allocation2 + $0x10] sm:$0xff] 0.0
      %53 = vst [vmem:[#allocation2 + $0x18] sm:$0xff] 0.0
      %vm54 = vcmask 64512
      %55 = vst.msk [vmem:[#allocation3] sm:$0xff] %vm54, 0.0
      %56 = vst.msk [vmem:[#allocation3 + $0x8] sm:$0xff] %vm54, 0.0
    $region33: #{tpu_custom_call.1} parent=1 // pred_fallthru
      _
    %v57 = vld [vmem:[%s0] sm:$0xff]
    %v58 = vld [vmem:[%s0 + $0x8] sm:$0xff]
    %v59 = vld [vmem:[%s1] sm:$0xf]
    %v60 = vld [vmem:[%s1 + $0x4] sm:$0xf]
    %v61 = vld [vmem:[%s1 + $0x8] sm:$0xf]
    %v62 = vld [vmem:[%s1 + $0xc] sm:$0xf]
    %v63 = vld [vmem:[%s1 + $0x10] sm:$0xf]
    %v64 = vld [vmem:[%s1 + $0x14] sm:$0xf]
    %v65 = vld [vmem:[%s1 + $0x18] sm:$0xf]
    %v66 = vld [vmem:[%s1 + $0x1c] sm:$0xf]
    %v67 = vld [vmem:[%s1 + $0x20] sm:$0xf]
    %v68 = vld [vmem:[%s1 + $0x24] sm:$0xf]
    %v69 = vld [vmem:[%s1 + $0x28] sm:$0xf]
    %v70 = vld [vmem:[%s1 + $0x2c] sm:$0xf]
    %v71 = vld [vmem:[%s1 + $0x30] sm:$0xf]
    %v72 = vld [vmem:[%s1 + $0x34] sm:$0xf]
    %v73 = vld [vmem:[%s1 + $0x38] sm:$0xf]
    %v74 = vld [vmem:[%s1 + $0x3c] sm:$0xf]
    %v75 = vld [vmem:[%s1 + $0x40] sm:$0xf]
    %v76 = vld [vmem:[%s1 + $0x44] sm:$0xf]
    %v77 = vld [vmem:[%s1 + $0x48] sm:$0xf]
    %v78 = vld [vmem:[%s1 + $0x4c] sm:$0xf]
    %v79 = vld [vmem:[%s1 + $0x50] sm:$0xf]
    %v80 = vld [vmem:[%s1 + $0x54] sm:$0xf]
    %v81 = vld [vmem:[%s1 + $0x58] sm:$0xf]
    %v82 = vld [vmem:[%s1 + $0x5c] sm:$0xf]
    %v83 = vld [vmem:[%s1 + $0x60] sm:$0xf]
    %v84 = vld [vmem:[%s1 + $0x64] sm:$0xf]
    %v85 = vld [vmem:[%s1 + $0x68] sm:$0xf]
    %v86 = vld [vmem:[%s1 + $0x6c] sm:$0xf]
    %v87 = vld [vmem:[%s1 + $0x70] sm:$0xf]
    %v88 = vld [vmem:[%s1 + $0x74] sm:$0xf]
    %v89 = vld [vmem:[%s1 + $0x78] sm:$0xf]
    %v90 = vld [vmem:[%s1 + $0x7c] sm:$0xf]
    %v91 = vld [vmem:[%s3] sm:$0xff]
    %v92 = vld [vmem:[%s3 + $0x8] sm:$0xff]
    %v93 = vld [vmem:[%s3 + $0x10] sm:$0xff]
    %v94 = vld [vmem:[%s3 + $0x18] sm:$0xff]
    %v95 = vld [vmem:[%s3 + $0x20] sm:$0xff]
    %v96 = vld [vmem:[%s3 + $0x28] sm:$0xff]
    %v97 = vld [vmem:[%s3 + $0x30] sm:$0xff]
    %v98 = vld [vmem:[%s3 + $0x38] sm:$0xff]
    %v99 = vld [vmem:[%s3 + $0x40] sm:$0xff]
    %v100 = vld [vmem:[%s3 + $0x48] sm:$0xff]
    %v101 = vld [vmem:[%s3 + $0x50] sm:$0xff]
    %v102 = vld [vmem:[%s3 + $0x58] sm:$0xff]
    %v103 = vld [vmem:[%s3 + $0x60] sm:$0xff]
    %v104 = vld [vmem:[%s3 + $0x68] sm:$0xff]
    %v105 = vld [vmem:[%s3 + $0x70] sm:$0xff]
    %v106 = vld [vmem:[%s3 + $0x78] sm:$0xff]
    %v107 = vunpack.c.0.s8 %v91
    %v108 = vunpack.c.0.s8 %v92
    %v109 = vunpack.c.1.s8 %v91
    %v110 = vunpack.c.1.s8 %v92
    %v111 = vunpack.c.2.s8 %v91
    %v112 = vunpack.c.2.s8 %v92
    %v113 = vunpack.c.3.s8 %v91
    %v114 = vunpack.c.3.s8 %v92
    %v115 = vunpack.c.0.s8 %v93
    %v116 = vunpack.c.0.s8 %v94
    %v117 = vunpack.c.1.s8 %v93
    %v118 = vunpack.c.1.s8 %v94
    %v119 = vunpack.c.2.s8 %v93
    %v120 = vunpack.c.2.s8 %v94
    %v121 = vunpack.c.3.s8 %v93
    %v122 = vunpack.c.3.s8 %v94
    %v123 = vunpack.c.0.s8 %v95
    %v124 = vunpack.c.0.s8 %v96
    %v125 = vunpack.c.1.s8 %v95
    %v126 = vunpack.c.1.s8 %v96
    %v127 = vunpack.c.2.s8 %v95
    %v128 = vunpack.c.2.s8 %v96
    %v129 = vunpack.c.3.s8 %v95
    %v130 = vunpack.c.3.s8 %v96
    %v131 = vunpack.c.0.s8 %v97
    %v132 = vunpack.c.0.s8 %v98
    %v133 = vunpack.c.1.s8 %v97
    %v134 = vunpack.c.1.s8 %v98
    %v135 = vunpack.c.2.s8 %v97
    %v136 = vunpack.c.2.s8 %v98
    %v137 = vunpack.c.3.s8 %v97
    %v138 = vunpack.c.3.s8 %v98
    %v139 = vunpack.c.0.s8 %v99
    %v140 = vunpack.c.0.s8 %v100
    %v141 = vunpack.c.1.s8 %v99
    %v142 = vunpack.c.1.s8 %v100
    %v143 = vunpack.c.2.s8 %v99
    %v144 = vunpack.c.2.s8 %v100
    %v145 = vunpack.c.3.s8 %v99
    %v146 = vunpack.c.3.s8 %v100
    %v147 = vunpack.c.0.s8 %v101
    %v148 = vunpack.c.0.s8 %v102
    %v149 = vunpack.c.1.s8 %v101
    %v150 = vunpack.c.1.s8 %v102
    %v151 = vunpack.c.2.s8 %v101
    %v152 = vunpack.c.2.s8 %v102
    %v153 = vunpack.c.3.s8 %v101
    %v154 = vunpack.c.3.s8 %v102
    %v155 = vunpack.c.0.s8 %v103
    %v156 = vunpack.c.0.s8 %v104
    %v157 = vunpack.c.1.s8 %v103
    %v158 = vunpack.c.1.s8 %v104
    %v159 = vunpack.c.2.s8 %v103
    %v160 = vunpack.c.2.s8 %v104
    %v161 = vunpack.c.3.s8 %v103
    %v162 = vunpack.c.3.s8 %v104
    %v163 = vunpack.c.0.s8 %v105
    %v164 = vunpack.c.0.s8 %v106
    %v165 = vunpack.c.1.s8 %v105
    %v166 = vunpack.c.1.s8 %v106
    %v167 = vunpack.c.2.s8 %v105
    %v168 = vunpack.c.2.s8 %v106
    %v169 = vunpack.c.3.s8 %v105
    %v170 = vunpack.c.3.s8 %v106
    %v171 = vcvt.s32.f32 %v107
    %v172 = vcvt.s32.f32 %v108
    %v173 = vcvt.s32.f32 %v109
    %v174 = vcvt.s32.f32 %v110
    %v175 = vcvt.s32.f32 %v111
    %v176 = vcvt.s32.f32 %v112
    %v177 = vcvt.s32.f32 %v113
    %v178 = vcvt.s32.f32 %v114
    %v179 = vcvt.s32.f32 %v115
    %v180 = vcvt.s32.f32 %v116
    %v181 = vcvt.s32.f32 %v117
    %v182 = vcvt.s32.f32 %v118
    %v183 = vcvt.s32.f32 %v119
    %v184 = vcvt.s32.f32 %v120
    %v185 = vcvt.s32.f32 %v121
    %v186 = vcvt.s32.f32 %v122
    %v187 = vcvt.s32.f32 %v123
    %v188 = vcvt.s32.f32 %v124
    %v189 = vcvt.s32.f32 %v125
    %v190 = vcvt.s32.f32 %v126
    %v191 = vcvt.s32.f32 %v127
    %v192 = vcvt.s32.f32 %v128
    %v193 = vcvt.s32.f32 %v129
    %v194 = vcvt.s32.f32 %v130
    %v195 = vcvt.s32.f32 %v131
    %v196 = vcvt.s32.f32 %v132
    %v197 = vcvt.s32.f32 %v133
    %v198 = vcvt.s32.f32 %v134
    %v199 = vcvt.s32.f32 %v135
    %v200 = vcvt.s32.f32 %v136
    %v201 = vcvt.s32.f32 %v137
    %v202 = vcvt.s32.f32 %v138
    %v203 = vcvt.s32.f32 %v139
    %v204 = vcvt.s32.f32 %v140
    %v205 = vcvt.s32.f32 %v141
    %v206 = vcvt.s32.f32 %v142
    %v207 = vcvt.s32.f32 %v143
    %v208 = vcvt.s32.f32 %v144
    %v209 = vcvt.s32.f32 %v145
    %v210 = vcvt.s32.f32 %v146
    %v211 = vcvt.s32.f32 %v147
    %v212 = vcvt.s32.f32 %v148
    %v213 = vcvt.s32.f32 %v149
    %v214 = vcvt.s32.f32 %v150
    %v215 = vcvt.s32.f32 %v151
    %v216 = vcvt.s32.f32 %v152
    %v217 = vcvt.s32.f32 %v153
    %v218 = vcvt.s32.f32 %v154
    %v219 = vcvt.s32.f32 %v155
    %v220 = vcvt.s32.f32 %v156
    %v221 = vcvt.s32.f32 %v157
    %v222 = vcvt.s32.f32 %v158
    %v223 = vcvt.s32.f32 %v159
    %v224 = vcvt.s32.f32 %v160
    %v225 = vcvt.s32.f32 %v161
    %v226 = vcvt.s32.f32 %v162
    %v227 = vcvt.s32.f32 %v163
    %v228 = vcvt.s32.f32 %v164
    %v229 = vcvt.s32.f32 %v165
    %v230 = vcvt.s32.f32 %v166
    %v231 = vcvt.s32.f32 %v167
    %v232 = vcvt.s32.f32 %v168
    %v233 = vcvt.s32.f32 %v169
    %v234 = vcvt.s32.f32 %v170
    %v235 = vld [vmem:[#allocation7] sm:$0xff]
    %v238 = vunpack.c.l.s4 1966171168
    %v239 = vunpack.c.0.s8 %v238
    %v240 = vlaneseq
    %v241 = vshrl.u32 %v240, 7
    %v242 = vsub.s32 %v239, %v241
    %v243 = vrot.slane %v235, %v242
    %v244 = vcombine.high %v243, %v243
    %v246 = vunpack.c.l.s4 1966171168
    %v247 = vunpack.c.0.s8 %v246
    %v248 = vlaneseq
    %v249 = vshrl.u32 %v248, 7
    %v250 = vsub.s32 %v247, %v249
    %v251 = vrot.slane %v243, %v250
    %v253 = vunpack.c.l.s4 1966171168
    %v254 = vunpack.c.0.s8 %v253
    %v255 = vlaneseq
    %v256 = vshrl.u32 %v255, 7
    %v257 = vsub.s32 %v254, %v256
    %v258 = vrot.slane %v244, %v257
    %v259 = vcombine.high %v251, %v251
    %v260 = vcombine.high %v258, %v258
    %v261 = vlaneseq
    %v262 = vshrl.u32 %v261, 7
    %v263 = vsub.s32 0, %v262
    %v264 = vrot.slane %v251, %v263
    %v265 = vlaneseq
    %v266 = vshrl.u32 %v265, 7
    %v267 = vsub.s32 1, %v266
    %v268 = vrot.slane %v251, %v267
    %v269 = vlaneseq
    %v270 = vshrl.u32 %v269, 7
    %v271 = vsub.s32 0, %v270
    %v272 = vrot.slane %v258, %v271
    %v273 = vlaneseq
    %v274 = vshrl.u32 %v273, 7
    %v275 = vsub.s32 1, %v274
    %v276 = vrot.slane %v258, %v275
    %v277 = vlaneseq
    %v278 = vshrl.u32 %v277, 7
    %v279 = vsub.s32 0, %v278
    %v280 = vrot.slane %v259, %v279
    %v281 = vlaneseq
    %v282 = vshrl.u32 %v281, 7
    %v283 = vsub.s32 1, %v282
    %v284 = vrot.slane %v259, %v283
    %v285 = vlaneseq
    %v286 = vshrl.u32 %v285, 7
    %v287 = vsub.s32 0, %v286
    %v288 = vrot.slane %v260, %v287
    %v289 = vlaneseq
    %v290 = vshrl.u32 %v289, 7
    %v291 = vsub.s32 1, %v290
    %v292 = vrot.slane %v260, %v291
    %v301 = vmul.f32 %v171, %v264
    %v302 = vmul.f32 %v172, %v268
    %v303 = vmul.f32 %v173, %v264
    %v304 = vmul.f32 %v174, %v268
    %v305 = vmul.f32 %v175, %v264
    %v306 = vmul.f32 %v176, %v268
    %v307 = vmul.f32 %v177, %v264
    %v308 = vmul.f32 %v178, %v268
    %v309 = vmul.f32 %v179, %v264
    %v310 = vmul.f32 %v180, %v268
    %v311 = vmul.f32 %v181, %v264
    %v312 = vmul.f32 %v182, %v268
    %v313 = vmul.f32 %v183, %v264
    %v314 = vmul.f32 %v184, %v268
    %v315 = vmul.f32 %v185, %v264
    %v316 = vmul.f32 %v186, %v268
    %v317 = vmul.f32 %v187, %v272
    %v318 = vmul.f32 %v188, %v276
    %v319 = vmul.f32 %v189, %v272
    %v320 = vmul.f32 %v190, %v276
    %v321 = vmul.f32 %v191, %v272
    %v322 = vmul.f32 %v192, %v276
    %v323 = vmul.f32 %v193, %v272
    %v324 = vmul.f32 %v194, %v276
    %v325 = vmul.f32 %v195, %v272
    %v326 = vmul.f32 %v196, %v276
    %v327 = vmul.f32 %v197, %v272
    %v328 = vmul.f32 %v198, %v276
    %v329 = vmul.f32 %v199, %v272
    %v330 = vmul.f32 %v200, %v276
    %v331 = vmul.f32 %v201, %v272
    %v332 = vmul.f32 %v202, %v276
    %v333 = vmul.f32 %v203, %v280
    %v334 = vmul.f32 %v204, %v284
    %v335 = vmul.f32 %v205, %v280
    %v336 = vmul.f32 %v206, %v284
    %v337 = vmul.f32 %v207, %v280
    %v338 = vmul.f32 %v208, %v284
    %v339 = vmul.f32 %v209, %v280
    %v340 = vmul.f32 %v210, %v284
    %v341 = vmul.f32 %v211, %v280
    %v342 = vmul.f32 %v212, %v284
    %v343 = vmul.f32 %v213, %v280
    %v344 = vmul.f32 %v214, %v284
    %v345 = vmul.f32 %v215, %v280
    %v346 = vmul.f32 %v216, %v284
    %v347 = vmul.f32 %v217, %v280
    %v348 = vmul.f32 %v218, %v284
    %v349 = vmul.f32 %v219, %v288
    %v350 = vmul.f32 %v220, %v292
    %v351 = vmul.f32 %v221, %v288
    %v352 = vmul.f32 %v222, %v292
    %v353 = vmul.f32 %v223, %v288
    %v354 = vmul.f32 %v224, %v292
    %v355 = vmul.f32 %v225, %v288
    %v356 = vmul.f32 %v226, %v292
    %v357 = vmul.f32 %v227, %v288
    %v358 = vmul.f32 %v228, %v292
    %v359 = vmul.f32 %v229, %v288
    %v360 = vmul.f32 %v230, %v292
    %v361 = vmul.f32 %v231, %v288
    %v362 = vmul.f32 %v232, %v292
    %v363 = vmul.f32 %v233, %v288
    %v364 = vmul.f32 %v234, %v292
    %v365 = vpack.c.bf16 %v303, %v301
    %v366 = vpack.c.bf16 %v304, %v302
    %v367 = vpack.c.bf16 %v307, %v305
    %v368 = vpack.c.bf16 %v308, %v306
    %v369 = vpack.c.bf16 %v311, %v309
    %v370 = vpack.c.bf16 %v312, %v310
    %v371 = vpack.c.bf16 %v315, %v313
    %v372 = vpack.c.bf16 %v316, %v314
    %v373 = vpack.c.bf16 %v319, %v317
    %v374 = vpack.c.bf16 %v320, %v318
    %v375 = vpack.c.bf16 %v323, %v321
    %v376 = vpack.c.bf16 %v324, %v322
    %v377 = vpack.c.bf16 %v327, %v325
    %v378 = vpack.c.bf16 %v328, %v326
    %v379 = vpack.c.bf16 %v331, %v329
    %v380 = vpack.c.bf16 %v332, %v330
    %v381 = vpack.c.bf16 %v335, %v333
    %v382 = vpack.c.bf16 %v336, %v334
    %v383 = vpack.c.bf16 %v339, %v337
    %v384 = vpack.c.bf16 %v340, %v338
    %v385 = vpack.c.bf16 %v343, %v341
    %v386 = vpack.c.bf16 %v344, %v342
    %v387 = vpack.c.bf16 %v347, %v345
    %v388 = vpack.c.bf16 %v348, %v346
    %v389 = vpack.c.bf16 %v351, %v349
    %v390 = vpack.c.bf16 %v352, %v350
    %v391 = vpack.c.bf16 %v355, %v353
    %v392 = vpack.c.bf16 %v356, %v354
    %v393 = vpack.c.bf16 %v359, %v357
    %v394 = vpack.c.bf16 %v360, %v358
    %v395 = vpack.c.bf16 %v363, %v361
    %v396 = vpack.c.bf16 %v364, %v362
    %v397 = vld [vmem:[#allocation2] sm:$0xff]
    %v398 = vld [vmem:[#allocation2 + $0x8] sm:$0xff]
    %v399 = vld [vmem:[#allocation2 + $0x10] sm:$0xff]
    %v400 = vld [vmem:[#allocation2 + $0x18] sm:$0xff]
    %v403 = vunpack.c.l.b16 %v57
    %v404 = vunpack.c.h.b16 %v57
    %v405 = vunpack.c.l.b16 %v58
    %v406 = vunpack.c.h.b16 %v58
    %v407 = vpack.c.b16 %v405, %v403
    %v408 = vpack.c.b16 %v406, %v404
    %411 = vmatprep.subr.bf16.mxu0 %v366
    %412 = vmatpush1.bf16.msra.mxu0 %v365
    %413 = vmatprep.subr.bf16.mxu0 %v368
    %414 = vmatpush1.bf16.msra.mxu0 %v367
    %415 = vmatprep.subr.bf16.mxu0 %v370
    %416 = vmatpush1.bf16.msra.mxu0 %v369
    %417 = vmatprep.subr.bf16.mxu0 %v372
    %418 = vmatpush1.bf16.msra.mxu0 %v371
    %419 = vmatprep.subr.bf16.mxu0 %v374
    %420 = vmatpush1.bf16.msra.mxu0 %v373
    %421 = vmatprep.subr.bf16.mxu0 %v376
    %422 = vmatpush1.bf16.msra.mxu0 %v375
    %423 = vmatprep.subr.bf16.mxu0 %v378
    %424 = vmatpush1.bf16.msra.mxu0 %v377
    %425 = vmatprep.subr.bf16.mxu0 %v380
    %426 = vmatpush1.bf16.msra.mxu0 %v379
    %427 = vmatprep.subr.bf16.mxu0 %v382
    %428 = vmatpush1.bf16.msra.mxu0 %v381
    %429 = vmatprep.subr.bf16.mxu0 %v384
    %430 = vmatpush1.bf16.msra.mxu0 %v383
    %431 = vmatprep.subr.bf16.mxu0 %v386
    %432 = vmatpush1.bf16.msra.mxu0 %v385
    %433 = vmatprep.subr.bf16.mxu0 %v388
    %434 = vmatpush1.bf16.msra.mxu0 %v387
    %435 = vmatprep.subr.bf16.mxu0 %v390
    %436 = vmatpush1.bf16.msra.mxu0 %v389
    %437 = vmatprep.subr.bf16.mxu0 %v392
    %438 = vmatpush1.bf16.msra.mxu0 %v391
    %439 = vmatprep.subr.bf16.mxu0 %v394
    %440 = vmatpush1.bf16.msra.mxu0 %v393
    %441 = vmatprep.subr.bf16.mxu0 %v396
    %442 = vmatpush1.bf16.msra.mxu0 %v395
    %443 = vmatprep.mubr.bf16.mxu0 %v408
    %444 = vmatmul.mubr.bf16.gmra.mrb[0].mxu0 %v407
    %v445 = vpop.f32.mrb[0].mxu0
    %v446 = vadd.f32 0.0, %v445
    %v447 = vpop.f32.mrb[0].mxu0
    %v448 = vadd.f32 0.0, %v447
    %v449 = vpop.f32.mrb[0].mxu0
    %v450 = vadd.f32 0.0, %v449
    %v451 = vpop.f32.mrb[0].mxu0
    %v452 = vadd.f32 0.0, %v451
    %453 = vdwg.mxu0
    %v454 = vadd.f32 %v397, %v446
    %v455 = vadd.f32 %v398, %v448
    %v456 = vadd.f32 %v399, %v450
    %v457 = vadd.f32 %v400, %v452
    %458 = vst [vmem:[#allocation2] sm:$0xff] %v454
    %459 = vst [vmem:[#allocation2 + $0x8] sm:$0xff] %v455
    %460 = vst [vmem:[#allocation2 + $0x10] sm:$0xff] %v456
    %461 = vst [vmem:[#allocation2 + $0x18] sm:$0xff] %v457
    %v462 = vld [vmem:[#allocation3] sm:$0xff]
    %v463 = vld [vmem:[#allocation3 + $0x8] sm:$0xff]
    %v496 = vunpack.c.l.b16 %v59
    %v497 = vunpack.c.l.b16 %v60
    %v498 = vunpack.c.l.b16 %v61
    %v499 = vunpack.c.l.b16 %v62
    %v500 = vunpack.c.l.b16 %v63
    %v501 = vunpack.c.l.b16 %v64
    %v502 = vunpack.c.l.b16 %v65
    %v503 = vunpack.c.l.b16 %v66
    %v504 = vunpack.c.l.b16 %v67
    %v505 = vunpack.c.l.b16 %v68
    %v506 = vunpack.c.l.b16 %v69
    %v507 = vunpack.c.l.b16 %v70
    %v508 = vunpack.c.l.b16 %v71
    %v509 = vunpack.c.l.b16 %v72
    %v510 = vunpack.c.l.b16 %v73
    %v511 = vunpack.c.l.b16 %v74
    %v512 = vunpack.c.l.b16 %v75
    %v513 = vunpack.c.l.b16 %v76
    %v514 = vunpack.c.l.b16 %v77
    %v515 = vunpack.c.l.b16 %v78
    %v516 = vunpack.c.l.b16 %v79
    %v517 = vunpack.c.l.b16 %v80
    %v518 = vunpack.c.l.b16 %v81
    %v519 = vunpack.c.l.b16 %v82
    %v520 = vunpack.c.l.b16 %v83
    %v521 = vunpack.c.l.b16 %v84
    %v522 = vunpack.c.l.b16 %v85
    %v523 = vunpack.c.l.b16 %v86
    %v524 = vunpack.c.l.b16 %v87
    %v525 = vunpack.c.l.b16 %v88
    %v526 = vunpack.c.l.b16 %v89
    %v527 = vunpack.c.l.b16 %v90
    %v528 = vpack.c.b16 %v497, %v496
    %v529 = vpack.c.b16 %v499, %v498
    %v530 = vpack.c.b16 %v501, %v500
    %v531 = vpack.c.b16 %v503, %v502
    %v532 = vpack.c.b16 %v505, %v504
    %v533 = vpack.c.b16 %v507, %v506
    %v534 = vpack.c.b16 %v509, %v508
    %v535 = vpack.c.b16 %v511, %v510
    %v536 = vpack.c.b16 %v513, %v512
    %v537 = vpack.c.b16 %v515, %v514
    %v538 = vpack.c.b16 %v517, %v516
    %v539 = vpack.c.b16 %v519, %v518
    %v540 = vpack.c.b16 %v521, %v520
    %v541 = vpack.c.b16 %v523, %v522
    %v542 = vpack.c.b16 %v525, %v524
    %v543 = vpack.c.b16 %v527, %v526
    %560 = vmatprep.subr.bf16.mxu0 0
    %561 = vmatpush1.bf16.msra.mxu0 %v528
    %562 = vmatprep.subr.bf16.mxu0 0
    %563 = vmatpush1.bf16.msra.mxu0 %v529
    %564 = vmatprep.subr.bf16.mxu0 0
    %565 = vmatpush1.bf16.msra.mxu0 %v530
    %566 = vmatprep.subr.bf16.mxu0 0
    %567 = vmatpush1.bf16.msra.mxu0 %v531
    %568 = vmatprep.subr.bf16.mxu0 0
    %569 = vmatpush1.bf16.msra.mxu0 %v532
    %570 = vmatprep.subr.bf16.mxu0 0
    %571 = vmatpush1.bf16.msra.mxu0 %v533
    %572 = vmatprep.subr.bf16.mxu0 0
    %573 = vmatpush1.bf16.msra.mxu0 %v534
    %574 = vmatprep.subr.bf16.mxu0 0
    %575 = vmatpush1.bf16.msra.mxu0 %v535
    %576 = vmatprep.subr.bf16.mxu0 0
    %577 = vmatpush1.bf16.msra.mxu0 %v536
    %578 = vmatprep.subr.bf16.mxu0 0
    %579 = vmatpush1.bf16.msra.mxu0 %v537
    %580 = vmatprep.subr.bf16.mxu0 0
    %581 = vmatpush1.bf16.msra.mxu0 %v538
    %582 = vmatprep.subr.bf16.mxu0 0
    %583 = vmatpush1.bf16.msra.mxu0 %v539
    %584 = vmatprep.subr.bf16.mxu0 0
    %585 = vmatpush1.bf16.msra.mxu0 %v540
    %586 = vmatprep.subr.bf16.mxu0 0
    %587 = vmatpush1.bf16.msra.mxu0 %v541
    %588 = vmatprep.subr.bf16.mxu0 0
    %589 = vmatpush1.bf16.msra.mxu0 %v542
    %590 = vmatprep.subr.bf16.mxu0 0
    %591 = vmatpush1.bf16.msra.mxu0 %v543
    %592 = vmatprep.mubr.bf16.mxu0 %v408
    %593 = vmatmul.mubr.bf16.gmra.mrb[0].mxu0 %v407
    %v594 = vpop.f32.mrb[0].mxu0
    %v595 = vadd.f32 0.0, %v594
    %v596 = vpop.f32.mrb[0].mxu0
    %v597 = vpop.f32.mrb[0].mxu0
    %v598 = vadd.f32 0.0, %v597
    %v599 = vpop.f32.mrb[0].mxu0
    %600 = vdwg.mxu0
    %v601 = vadd.f32 %v462, %v595
    %v602 = vadd.f32 %v463, %v598
    %vm603 = vcmask 64512
    %604 = vst.msk [vmem:[#allocation3] sm:$0xff] %vm603, %v601
    %605 = vst.msk [vmem:[#allocation3 + $0x8] sm:$0xff] %vm603, %v602
    // Predicated region
    $region34: #{tpu_custom_call.1} parent=1 // pred_check
      %p606 = pneg %p46
    $region35: #{tpu_custom_call.1} parent=1 // pred_check_branch
      %608 = sbr.rel (%p606) target = $region37
    $region36: #{tpu_custom_call.1} parent=1 // pred_region
      %v609 = vld [vmem:[#allocation3] sm:$0xff]
      %v610 = vld [vmem:[#allocation3 + $0x8] sm:$0xff]
      %v611 = vpack.c.bf16 %v610, %v609
      %v612 = vld [vmem:[#allocation4] sm:$0xff]
      %v614 = vunpack.c.l.b16 %v612
      %v615 = vunpack.c.h.b16 %v612
      %v616 = vpack.c.b16 %v614, %v614
      %v617 = vpack.c.b16 %v615, %v615
      %v619 = vsel %vm603, %v611, 0
      %vm621 = vcmask 1043456
      %v623 = vsel %vm621, %v616, 0
      %v626 = vsel %vm621, %v617, 0
      %628 = vmatprep.subr.bf16.mxu0 %v626
      %629 = vmatpush1.bf16.msra.mxu0 %v623
      %630 = vmatprep.subr.bf16.mxu0 0
      %631 = vmatpush1.bf16.msra.mxu0 0
      %632 = vmatprep.subr.bf16.mxu0 0
      %633 = vmatpush1.bf16.msra.mxu0 0
      %634 = vmatprep.subr.bf16.mxu0 0
      %635 = vmatpush1.bf16.msra.mxu0 0
      %636 = vmatprep.subr.bf16.mxu0 0
      %637 = vmatpush1.bf16.msra.mxu0 0
      %638 = vmatprep.subr.bf16.mxu0 0
      %639 = vmatpush1.bf16.msra.mxu0 0
      %640 = vmatprep.subr.bf16.mxu0 0
      %641 = vmatpush1.bf16.msra.mxu0 0
      %642 = vmatprep.subr.bf16.mxu0 0
      %643 = vmatpush1.bf16.msra.mxu0 0
      %644 = vmatprep.subr.bf16.mxu0 0
      %645 = vmatpush1.bf16.msra.mxu0 0
      %646 = vmatprep.subr.bf16.mxu0 0
      %647 = vmatpush1.bf16.msra.mxu0 0
      %648 = vmatprep.subr.bf16.mxu0 0
      %649 = vmatpush1.bf16.msra.mxu0 0
      %650 = vmatprep.subr.bf16.mxu0 0
      %651 = vmatpush1.bf16.msra.mxu0 0
      %652 = vmatprep.subr.bf16.mxu0 0
      %653 = vmatpush1.bf16.msra.mxu0 0
      %654 = vmatprep.subr.bf16.mxu0 0
      %655 = vmatpush1.bf16.msra.mxu0 0
      %656 = vmatprep.subr.bf16.mxu0 0
      %657 = vmatpush1.bf16.msra.mxu0 0
      %658 = vmatprep.subr.bf16.mxu0 0
      %659 = vmatpush1.bf16.msra.mxu0 0
      %660 = vmatprep.mubr.bf16.mxu0 0
      %661 = vmatmul.mubr.bf16.gmra.mrb[0].mxu0 %v619
      %v662 = vpop.f32.mrb[0].mxu0
      %v663 = vadd.f32 0.0, %v662
      %v664 = vpop.f32.mrb[0].mxu0
      %v665 = vadd.f32 0.0, %v664
      %v666 = vpop.f32.mrb[0].mxu0
      %v667 = vadd.f32 0.0, %v666
      %v668 = vpop.f32.mrb[0].mxu0
      %v669 = vadd.f32 0.0, %v668
      %670 = vdwg.mxu0
      %v671 = vld [vmem:[#allocation2] sm:$0xff]
      %v672 = vld [vmem:[#allocation2 + $0x8] sm:$0xff]
      %v673 = vld [vmem:[#allocation2 + $0x10] sm:$0xff]
      %v674 = vld [vmem:[#allocation2 + $0x18] sm:$0xff]
      %v675 = vadd.f32 %v671, %v663
      %v676 = vadd.f32 %v672, %v665
      %v677 = vadd.f32 %v673, %v667
      %v678 = vadd.f32 %v674, %v669
      %v679 = vpack.c.bf16 %v677, %v675
      %v680 = vpack.c.bf16 %v678, %v676
      %v683 = vunpack.c.l.b16 %v679
      %v684 = vunpack.c.l.b16 %v680
      %v685 = vunpack.c.h.b16 %v679
      %v686 = vunpack.c.h.b16 %v680
      %v687 = vpack.c.b16 %v684, %v683
      %v688 = vpack.c.b16 %v686, %v685
      %691 = vst [vmem:[#allocation9] sm:$0xff] %v687
      %692 = vst [vmem:[#allocation9 + $0x8] sm:$0xff] %v688
    $region37: #{tpu_custom_call.1} parent=1 // pred_fallthru
      _
    // Predicated region
    $region38: #{tpu_custom_call.1} parent=1 // pred_check
      _
    $region39: #{tpu_custom_call.1} parent=1 // pred_check_branch
      %694 = sbr.rel (0) target = $region41
    $region40: #{tpu_custom_call.1} parent=1 // pred_region
      %s696 = ssub.s32 256, 256
      %697 = vsyncadd [#allocation6], %s696
      %s698 = sshll.u32 [#allocation9], 4
      %s699 = int_to_ptr.vmem [resolvable:$true] %s698
      %704 = dma.vmem_to_hbm [thread:$0]  %s699, 256, %s5, [#allocation6], 128, 128, 8
    $region41: #{tpu_custom_call.1} parent=1 // pred_fallthru
      _
    // Predicated region
    $region42: #{tpu_custom_call.1} parent=1 // pred_check
      _
    $region43: #{tpu_custom_call.1} parent=1 // pred_check_branch
      %706 = sbr.rel (0) target = $region45
    $region44: #{tpu_custom_call.1} parent=1 // pred_region
      %707 = dma.done [#allocation6], 256
    $region45: #{tpu_custom_call.1} parent=1 // pred_fallthru
      _
    %708 = vsyncpa [#allocation5], 1
    %709 = vsyncpa [#allocation8], 1
    %710 = vsyncpa [#allocation6], 1

</llo_original>
